<compile_context>
chip_gen: v6e
topology: v6e:2x2x1
jax: 0.10.0
libtpu: 0.0.40
codegen_flags: <defaults>
</compile_context>

<pallas_src>
import functools

import jax
import jax.numpy as jnp
from jax import lax
from jax.experimental import pallas as pl
from jax.experimental.pallas import tpu as pltpu


def _round_up(a, m):
    return -(-a // m) * m


# ---------------------------------------------------------------------------
# Kernels
# ---------------------------------------------------------------------------

def _epilogue(h2, w3_row, b3, o_ref):
    # Final Linear(hidden2, 1): contract over hidden2 with the RHS transposed
    # so the result is already lane-dense: (1, h2d) x (tm, h2d)^T -> (1, tm).
    logits = lax.dot_general(w3_row, h2, (((1,), (1,)), ((), ())),
                             preferred_element_type=jnp.float32)
    logits = jnp.clip(logits + b3, -1.0e10, 1.0e10)          # torch.clamp
    # Numerically-safe sigmoid: +/-30 saturates sigmoid at f32 precision, so
    # exp() never produces inf; approx reciprocal stays on the EUP slot.
    z = jnp.clip(logits, -30.0, 30.0)
    o_ref[...] = pl.reciprocal(1.0 + jnp.exp(-z), approx=True)


def _mlp_kernel(x_ref, w1_ref, b1_ref, w2_ref, b2_ref, w3_ref, b3_ref, o_ref):
    x = x_ref[...].astype(w1_ref.dtype)                      # in-kernel cast
    h1 = jnp.dot(x, w1_ref[...], preferred_element_type=jnp.float32)
    h1 = jnp.maximum(h1 + b1_ref[...], 0.0)                  # f32 ReLU
    h2 = jnp.dot(h1.astype(w2_ref.dtype), w2_ref[...],
                 preferred_element_type=jnp.float32)
    h2 = jnp.maximum(h2 + b2_ref[...], 0.0)                  # f32 ReLU
    _epilogue(h2, w3_ref[...], b3_ref[0, 0], o_ref)


def _mlp_cn_kernel(x_ref, ex_ref, wex_ref, w1_ref, b1_ref, w2_ref, b2_ref,
                   w3_ref, b3_ref, o_ref):
    # common_neighbors variant: encoder + concat folded into layer 1.
    x = x_ref[...].astype(w1_ref.dtype)
    pre1 = jnp.dot(x, w1_ref[...], preferred_element_type=jnp.float32)
    pre1 = pre1 + ex_ref[...] * wex_ref[...]                 # (tm,1)*(1,h1) VPU
    h1 = jnp.maximum(pre1 + b1_ref[...], 0.0)
    h2 = jnp.dot(h1.astype(w2_ref.dtype), w2_ref[...],
                 preferred_element_type=jnp.float32)
    h2 = jnp.maximum(h2 + b2_ref[...], 0.0)
    _epilogue(h2, w3_ref[...], b3_ref[0, 0], o_ref)


# ---------------------------------------------------------------------------
# pallas_call builders
# ---------------------------------------------------------------------------

def _cost(n, d, h1, h2, in_bytes, w_bytes):
    return pl.CostEstimate(
        flops=2 * n * (d * h1 + h1 * h2 + h2),
        transcendentals=n,                       # one exp per row (sigmoid)
        bytes_accessed=in_bytes + w_bytes + n * 4)


def _mlp_pallas(x, w1, b1, w2, b2, w3_row, b3, *, tm):
    n, d = x.shape
    h1 = w1.shape[1]
    h2 = w2.shape[1]
    nb = pl.cdiv(n, tm)
    resident = lambda i: (0, 0)
    w_bytes = ((w1.size + w2.size) * w1.dtype.itemsize + (h1 + h2 + 2) * 4)
    return pl.pallas_call(
        _mlp_kernel,
        out_shape=jax.ShapeDtypeStruct((1, n), jnp.float32),
        grid_spec=pltpu.PrefetchScalarGridSpec(
            num_scalar_prefetch=0,
            grid=(nb,),
            in_specs=[
                pl.BlockSpec((tm, d), lambda i: (i, 0)),       # x tile (f32 stream)
                pl.BlockSpec((d, h1), resident),               # W1 (resident)
                pl.BlockSpec((1, h1), resident),               # b1
                pl.BlockSpec((h1, h2), resident),              # W2
                pl.BlockSpec((1, h2), resident),               # b2
                pl.BlockSpec((1, h2), resident),               # W3 row
                pl.BlockSpec(memory_space=pltpu.MemorySpace.SMEM),  # b3 scalar
            ],
            out_specs=pl.BlockSpec((1, tm), lambda i: (0, i)),  # lane-dense out
        ),
        compiler_params=pltpu.CompilerParams(
            dimension_semantics=("parallel",)),
        cost_estimate=_cost(n, d, h1, h2, n * d * x.dtype.itemsize, w_bytes),
    )(x, w1, b1, w2, b2, w3_row, b3)


def _mlp_cn_pallas(x, ex, wex_row, w1, b1, w2, b2, w3_row, b3, *, tm):
    n, d = x.shape
    h1 = w1.shape[1]
    h2 = w2.shape[1]
    nb = pl.cdiv(n, tm)
    resident = lambda i: (0, 0)
    w_bytes = ((w1.size + w2.size) * w1.dtype.itemsize + (3 * h1 + 2 * h2 + 2) * 4)
    return pl.pallas_call(
        _mlp_cn_kernel,
        out_shape=jax.ShapeDtypeStruct((1, n), jnp.float32),
        grid_spec=pltpu.PrefetchScalarGridSpec(
            num_scalar_prefetch=0,
            grid=(nb,),
            in_specs=[
                pl.BlockSpec((tm, d), lambda i: (i, 0)),       # x tile
                pl.BlockSpec((tm, 1), lambda i: (i, 0)),       # ex tile (tiny)
                pl.BlockSpec((1, h1), resident),               # we @ W1_bot
                pl.BlockSpec((d, h1), resident),               # W1_top
                pl.BlockSpec((1, h1), resident),               # b1_eff
                pl.BlockSpec((h1, h2), resident),              # W2
                pl.BlockSpec((1, h2), resident),               # b2
                pl.BlockSpec((1, h2), resident),               # W3 row
                pl.BlockSpec(memory_space=pltpu.MemorySpace.SMEM),  # b3
            ],
            out_specs=pl.BlockSpec((1, tm), lambda i: (0, i)),
        ),
        compiler_params=pltpu.CompilerParams(
            dimension_semantics=("parallel",)),
        cost_estimate=_cost(n, d, h1, h2,
                            n * (d * x.dtype.itemsize + 4), w_bytes),
    )(x, ex, wex_row, w1, b1, w2, b2, w3_row, b3)


# ---------------------------------------------------------------------------
# Tile selection + jit wrappers (no padding, no wrapper-side casts)
# ---------------------------------------------------------------------------

def _pick_tm(n, d, h1, h2, *, tm_max=4096, vmem_budget=8 << 20):
    """Pick the batch tile.

    Small batches -> one exact block (full-dim exemption from the (8,128)
    rule, no padding).  Large batches -> biggest multiple of 512 keeping the
    double-buffered f32 x tile + f32 intermediates under ~8 MiB (fits v5e's
    16 MiB / v7x's 32 MiB default scoped VMEM), capped at tm_max, and lowered
    so the grid has >= 2 blocks (v7x megacore keeps both TCs busy).
    """
    if n <= 1024:
        return n
    per_row = 2 * d * 4 + (h1 + h2) * 4 + 64     # x dbl-buf + f32 h1/h2 + slack
    cap = max(512, (vmem_budget // per_row) // 512 * 512)
    tm = min(tm_max, cap)
    if pl.cdiv(n, tm) < 2:
        tm = max(512, _round_up(pl.cdiv(n, 2), 512))
    return tm


@functools.partial(jax.jit, static_argnames=("tm",))
def _forward(x, w1, b1, w2, b2, w3_row, b3, *, tm):
    n = x.shape[0]
    out_row = _mlp_pallas(x, w1, b1, w2, b2, w3_row, b3, tm=tm)
    return out_row.reshape(n, 1)


@functools.partial(jax.jit, static_argnames=("tm",))
def _forward_cn(x, ex, wex_row, w1_top, b1_eff, w2, b2, w3_row, b3, *, tm):
    n = x.shape[0]
    out_row = _mlp_cn_pallas(x, ex, wex_row, w1_top, b1_eff, w2, b2,
                             w3_row, b3, tm=tm)
    return out_row.reshape(n, 1)


# ---------------------------------------------------------------------------
# Module
# ---------------------------------------------------------------------------

class LinkClassifierMLP:
    """JAX/Pallas re-implementation of the PyTorch LinkClassifierMLP."""

    def __init__(self, dim, dropout=0.0, common_neighbors=False, *, key):
        _dim = dim
        in_dim = dim * 5 if common_neighbors else dim * 4
        hidden1, hidden2 = in_dim // 2, in_dim // 4
        self.common_neighbors = common_neighbors
        self.hidden1, self.hidden2 = hidden1, hidden2
        self.x_dim = dim * 4                       # raw feature width (pre-concat)

        ks = jax.random.split(key, 8)

        def linear_init(kw, kb, fan_in, fan_out):
            # torch.nn.Linear default: U(-1/sqrt(fan_in), 1/sqrt(fan_in))
            bound = 1.0 / float(fan_in) ** 0.5
            w = jax.random.uniform(kw, (fan_in, fan_out), jnp.float32,
                                   -bound, bound)
            b = jax.random.uniform(kb, (1, fan_out), jnp.float32,
                                   -bound, bound)
            return w, b

        self.w1, self.b1 = linear_init(ks[0], ks[1], in_dim, hidden1)
        self.w2, self.b2 = linear_init(ks[2], ks[3], hidden1, hidden2)
        w3, b3 = linear_init(ks[4], ks[5], hidden2, 1)
        self.w3_row = w3.T               # (1, hidden2) row for the kernel
        self.b3 = b3                     # (1, 1)
        if common_neighbors:
            self.we, self.be = linear_init(ks[6], ks[7], 1, _dim)

        # Pre-pack weights per matmul dtype (and fold the CN encoder+concat
        # into layer 1) once, so the jitted graph has zero per-call casts:
        #   concat([x, ex@we + be]) @ W1
        #     = x @ W1[:d] + ex @ (we @ W1[d:]) + (b1 + be @ W1[d:])
        self._packed = {}
        for mm in (jnp.bfloat16, jnp.float32):
            if common_neighbors:
                w1_top = self.w1[:self.x_dim]
                w1_bot = self.w1[self.x_dim:]
                wex_row = self.we @ w1_bot               # (1, hidden1), f32
                b1_eff = self.b1 + self.be @ w1_bot      # (1, hidden1), f32
                self._packed[mm] = (wex_row, w1_top.astype(mm), b1_eff,
                                    self.w2.astype(mm), self.b2,
                                    self.w3_row, self.b3)
            else:
                self._packed[mm] = (self.w1.astype(mm), self.b1,
                                    self.w2.astype(mm), self.b2,
                                    self.w3_row, self.b3)

    def __call__(self, x, ex=None, *, tm_max=4096, use_bf16=True):
        n = x.shape[0]
        tm = _pick_tm(n, self.x_dim, self.hidden1, self.hidden2, tm_max=tm_max)
        mm = jnp.bfloat16 if use_bf16 else jnp.float32
        x = x.astype(jnp.float32)
        if self.common_neighbors:
            assert ex is not None, "common_neighbors=True requires ex"
            wex_row, w1_top, b1_eff, w2, b2, w3_row, b3 = self._packed[mm]
            return _forward_cn(x, ex.astype(jnp.float32), wex_row, w1_top,
                               b1_eff, w2, b2, w3_row, b3, tm=tm)
        w1, b1, w2, b2, w3_row, b3 = self._packed[mm]
        return _forward(x, w1, b1, w2, b2, w3_row, b3, tm=tm)


# ---------------------------------------------------------------------------
# Pure-JAX reference (f32, HIGHEST precision) for sanity checks
# ---------------------------------------------------------------------------

def _reference(model, x, ex=None):
    if ex is not None:
        enc = ex @ model.we + model.be
        x = jnp.concatenate([x, enc], axis=1)
    hp = lax.Precision.HIGHEST
    h1 = jnp.maximum(jnp.dot(x, model.w1, precision=hp) + model.b1, 0.0)
    h2 = jnp.maximum(jnp.dot(h1, model.w2, precision=hp) + model.b2, 0.0)
    logits = jnp.clip(jnp.dot(h2, model.w3_row.T, precision=hp) + model.b3,
                      -1.0e10, 1.0e10)
    return jax.nn.sigmoid(logits)


if __name__ == "__main__":
    key = jax.random.PRNGKey(0)
    k_p, k_p_cn, k_x, k_x2, k_ex = jax.random.split(key, 5)

    dim = 32                                   # MLP input width is 4*dim = 128
    model = LinkClassifierMLP(dim, dropout=0.0, common_neighbors=False,
                              key=k_p)

    # 1) tiny batch: single exact block (no padding), bf16 matmuls
    x_small = jax.random.normal(k_x, (8, 4 * dim), dtype=jnp.float32)
    out_small = jax.block_until_ready(model(x_small))
    ref_small = _reference(model, x_small)
    assert out_small.shape == (8, 1)
    assert jnp.allclose(out_small, ref_small, atol=2e-2)

    # 2) same batch, f32 matmul path
    out_f32 = jax.block_until_ready(model(x_small, use_bf16=False))
    assert jnp.allclose(out_f32, ref_small, atol=2e-2)

    # 3) larger batch: multi-block grid (>= 2 blocks) + masked partial tail
    x_big = jax.random.normal(k_x2, (3000, 4 * dim), dtype=jnp.float32)
    out_big = jax.block_until_ready(model(x_big))
    ref_big = _reference(model, x_big)
    assert out_big.shape == (3000, 1)
    assert jnp.allclose(out_big, ref_big, atol=2e-2)

    # 4) common_neighbors variant (encoder + concat fused into the kernel)
    model_cn = LinkClassifierMLP(dim, dropout=0.0, common_neighbors=True,
                                 key=k_p_cn)
    ex = jax.random.normal(k_ex, (8, 1), dtype=jnp.float32)
    out_cn = jax.block_until_ready(model_cn(x_small, ex))
    ref_cn = _reference(model_cn, x_small, ex)
    assert out_cn.shape == (8, 1)
    assert jnp.allclose(out_cn, ref_cn, atol=2e-2)

    print("KERNEL_OK")
</pallas_src>

<mosaic_0001>
module attributes {stable_mosaic.version = 11 : i64} {
  func.func @_mlp_kernel(%arg0: i32, %arg1: memref<8x128xf32, #tpu.memory_space<vmem>>, %arg2: memref<128x64xbf16, #tpu.memory_space<vmem>>, %arg3: memref<1x64xf32, #tpu.memory_space<vmem>>, %arg4: memref<64x32xbf16, #tpu.memory_space<vmem>>, %arg5: memref<1x32xf32, #tpu.memory_space<vmem>>, %arg6: memref<1x32xf32, #tpu.memory_space<vmem>>, %arg7: memref<1x1xf32, #tpu.memory_space<smem>>, %arg8: memref<1x8xf32, #tpu.memory_space<vmem>>) attributes {dimension_semantics = [#tpu.dimension_semantics<parallel>], iteration_bounds = array<i64: 1>, scalar_prefetch = 0 : i64, scratch_operands = 0 : i64, tpu.core_type = #tpu.core_type<tc>, window_params = [{transform_indices = @transform_0, window_bounds = array<i64: 8, 128>}, {pipeline_mode = #tpu.pipeline_mode<synchronous>, transform_indices = @transform_1, window_bounds = array<i64: 128, 64>}, {pipeline_mode = #tpu.pipeline_mode<synchronous>, transform_indices = @transform_2, window_bounds = array<i64: 1, 64>}, {pipeline_mode = #tpu.pipeline_mode<synchronous>, transform_indices = @transform_3, window_bounds = array<i64: 64, 32>}, {pipeline_mode = #tpu.pipeline_mode<synchronous>, transform_indices = @transform_4, window_bounds = array<i64: 1, 32>}, {pipeline_mode = #tpu.pipeline_mode<synchronous>, transform_indices = @transform_5, window_bounds = array<i64: 1, 32>}, {transform_indices = @transform_6, window_bounds = array<i64: 1, 1>}, {transform_indices = @transform_7, window_bounds = array<i64: 1, 8>}]} {
    %c0 = arith.constant 0 : index
    %c0_0 = arith.constant 0 : index
    %0 = vector.load %arg1[%c0, %c0_0] : memref<8x128xf32, #tpu.memory_space<vmem>>, vector<8x128xf32>
    %1 = arith.truncf %0 : vector<8x128xf32> to vector<8x128xbf16>
    %c0_1 = arith.constant 0 : index
    %c0_2 = arith.constant 0 : index
    %2 = vector.load %arg2[%c0_1, %c0_2] : memref<128x64xbf16, #tpu.memory_space<vmem>>, vector<128x64xbf16>
    %cst = arith.constant dense<0.000000e+00> : vector<8x64xf32>
    %3 = tpu.matmul %1, %2, %cst {dimension_numbers = #tpu.dot_dimension_numbers<[1], [0], [0], [1], [0, 0, 1, 1], [], []>} : vector<8x128xbf16>, vector<128x64xbf16>, vector<8x64xf32> -> vector<8x64xf32>
    %c0_3 = arith.constant 0 : index
    %c0_4 = arith.constant 0 : index
    %4 = vector.load %arg3[%c0_3, %c0_4] : memref<1x64xf32, #tpu.memory_space<vmem>>, vector<1x64xf32>
    %5 = vector.broadcast %4 : vector<1x64xf32> to vector<8x64xf32>
    %6 = arith.addf %3, %5 : vector<8x64xf32>
    %cst_5 = arith.constant 0.000000e+00 : f32
    %7 = vector.broadcast %cst_5 : f32 to vector<8x64xf32>
    %8 = arith.maximumf %6, %7 : vector<8x64xf32>
    %9 = arith.truncf %8 : vector<8x64xf32> to vector<8x64xbf16>
    %c0_6 = arith.constant 0 : index
    %c0_7 = arith.constant 0 : index
    %10 = vector.load %arg4[%c0_6, %c0_7] : memref<64x32xbf16, #tpu.memory_space<vmem>>, vector<64x32xbf16>
    %cst_8 = arith.constant dense<0.000000e+00> : vector<8x32xf32>
    %11 = tpu.matmul %9, %10, %cst_8 {dimension_numbers = #tpu.dot_dimension_numbers<[1], [0], [0], [1], [0, 0, 1, 1], [], []>} : vector<8x64xbf16>, vector<64x32xbf16>, vector<8x32xf32> -> vector<8x32xf32>
    %c0_9 = arith.constant 0 : index
    %c0_10 = arith.constant 0 : index
    %12 = vector.load %arg5[%c0_9, %c0_10] : memref<1x32xf32, #tpu.memory_space<vmem>>, vector<1x32xf32>
    %13 = vector.broadcast %12 : vector<1x32xf32> to vector<8x32xf32>
    %14 = arith.addf %11, %13 : vector<8x32xf32>
    %cst_11 = arith.constant 0.000000e+00 : f32
    %15 = vector.broadcast %cst_11 : f32 to vector<8x32xf32>
    %16 = arith.maximumf %14, %15 : vector<8x32xf32>
    %c0_12 = arith.constant 0 : index
    %c0_13 = arith.constant 0 : index
    %17 = vector.load %arg6[%c0_12, %c0_13] : memref<1x32xf32, #tpu.memory_space<vmem>>, vector<1x32xf32>
    %c0_14 = arith.constant 0 : index
    %c0_15 = arith.constant 0 : index
    %18 = memref.load %arg7[%c0_14, %c0_15] : memref<1x1xf32, #tpu.memory_space<smem>>
    %cst_16 = arith.constant dense<0.000000e+00> : vector<1x8xf32>
    %19 = tpu.matmul %17, %16, %cst_16 {dimension_numbers = #tpu.dot_dimension_numbers<[1], [1], [0], [0], [0, 0, 1, 0], [], []>} : vector<1x32xf32>, vector<8x32xf32>, vector<1x8xf32> -> vector<1x8xf32>
    %20 = vector.broadcast %18 : f32 to vector<1x8xf32>
    %21 = arith.addf %19, %20 : vector<1x8xf32>
    %cst_17 = arith.constant -1.000000e+10 : f32
    %cst_18 = arith.constant 1.000000e+10 : f32
    %22 = vector.broadcast %cst_17 : f32 to vector<1x8xf32>
    %23 = arith.maximumf %22, %21 : vector<1x8xf32>
    %24 = vector.broadcast %cst_18 : f32 to vector<1x8xf32>
    %25 = arith.minimumf %24, %23 : vector<1x8xf32>
    %cst_19 = arith.constant -3.000000e+01 : f32
    %cst_20 = arith.constant 3.000000e+01 : f32
    %26 = vector.broadcast %cst_19 : f32 to vector<1x8xf32>
    %27 = arith.maximumf %26, %25 : vector<1x8xf32>
    %28 = vector.broadcast %cst_20 : f32 to vector<1x8xf32>
    %29 = arith.minimumf %28, %27 : vector<1x8xf32>
    %cst_21 = arith.constant 0.000000e+00 : f32
    %30 = vector.broadcast %cst_21 : f32 to vector<1x8xf32>
    %31 = arith.subf %30, %29 : vector<1x8xf32>
    %32 = math.exp %31 : vector<1x8xf32>
    %cst_22 = arith.constant 1.000000e+00 : f32
    %33 = vector.broadcast %cst_22 : f32 to vector<1x8xf32>
    %34 = arith.addf %33, %32 : vector<1x8xf32>
    %35 = tpu.reciprocal %34 {approx = true} : vector<1x8xf32> -> vector<1x8xf32>
    %c0_23 = arith.constant 0 : index
    %c0_24 = arith.constant 0 : index
    %36 = vector.load %arg8[%c0_23, %c0_24] : memref<1x8xf32, #tpu.memory_space<vmem>>, vector<1x8xf32>
    tpu.vector_store %arg8[%c0_23, %c0_24], %35 {strides = array<i32>} : memref<1x8xf32, #tpu.memory_space<vmem>>, vector<1x8xf32>,
    return
  }
  func.func @transform_0(%arg0: i32) -> (i32, i32) {
    %c0_i32 = arith.constant 0 : i32
    %c0_i32_0 = arith.constant 0 : i32
    return %arg0, %c0_i32 : i32, i32
  }
  func.func @transform_1(%arg0: i32) -> (i32, i32) {
    %c0_i32 = arith.constant 0 : i32
    %c0_i32_0 = arith.constant 0 : i32
    %c0_i32_1 = arith.constant 0 : i32
    return %c0_i32, %c0_i32_0 : i32, i32
  }
  func.func @transform_2(%arg0: i32) -> (i32, i32) {
    %c0_i32 = arith.constant 0 : i32
    %c0_i32_0 = arith.constant 0 : i32
    %c0_i32_1 = arith.constant 0 : i32
    return %c0_i32, %c0_i32_0 : i32, i32
  }
  func.func @transform_3(%arg0: i32) -> (i32, i32) {
    %c0_i32 = arith.constant 0 : i32
    %c0_i32_0 = arith.constant 0 : i32
    %c0_i32_1 = arith.constant 0 : i32
    return %c0_i32, %c0_i32_0 : i32, i32
  }
  func.func @transform_4(%arg0: i32) -> (i32, i32) {
    %c0_i32 = arith.constant 0 : i32
    %c0_i32_0 = arith.constant 0 : i32
    %c0_i32_1 = arith.constant 0 : i32
    return %c0_i32, %c0_i32_0 : i32, i32
  }
  func.func @transform_5(%arg0: i32) -> (i32, i32) {
    %c0_i32 = arith.constant 0 : i32
    %c0_i32_0 = arith.constant 0 : i32
    %c0_i32_1 = arith.constant 0 : i32
    return %c0_i32, %c0_i32_0 : i32, i32
  }
  func.func @transform_6(%arg0: i32) -> (i32, i32) {
    %c0_i32 = arith.constant 0 : i32
    %c0_i32_0 = arith.constant 0 : i32
    %c0_i32_1 = arith.constant 0 : i32
    return %c0_i32, %c0_i32_0 : i32, i32
  }
  func.func @transform_7(%arg0: i32) -> (i32, i32) {
    %c0_i32 = arith.constant 0 : i32
    %c0_i32_0 = arith.constant 0 : i32
    return %c0_i32, %arg0 : i32, i32
  }
}

</mosaic_0001>

<llo_original>
// kernel: _forward.1
$region0: #{_forward.1}
  #allocation0 [shape = 'u32[]', space=smem, size = 0x4, offset = 0x4, fixed_abs, tag = 'smem constant byte address 0x4 - core index']
  #allocation1 [shape = 'u32[144,128]{1,0:T(1,128)}', space=vmem, size = 0x12000, scoped, tag = 'internal scratch']
  #allocation2 [shape = 'f32[1,1]{1,0:T(1,128)S(6)}', space=smem, size = 0x200, scoped, tag = 'scoped memory for _forward.1']
  %s0 = inlined_call_operand.vmem [shape: f32[8,128], index: 0, kind: input, shape index: {}]
  %s1 = inlined_call_operand.vmem [shape: bf16[128,64], index: 1, kind: input, shape index: {}]
  %s2 = inlined_call_operand.vmem [shape: f32[1,64], index: 2, kind: input, shape index: {}]
  %s3 = inlined_call_operand.vmem [shape: bf16[64,32], index: 3, kind: input, shape index: {}]
  %s4 = inlined_call_operand.vmem [shape: f32[1,32], index: 4, kind: input, shape index: {}]
  %s5 = inlined_call_operand.vmem [shape: f32[1,32], index: 5, kind: input, shape index: {}]
  %s6 = inlined_call_operand.<no memory space> [shape: f32[1,1], index: 6, kind: input, shape index: {}]
  %s7 = inlined_call_operand.hbm [shape: f32[1,8], index: 7, kind: output, shape index: {}]
  %s8 = sld [smem:[#allocation0]]
  $region38: #{_forward.1} parent=0
    _
  %s10 = ssub.s32 1, %s8
  %s11 = scalar_select 0, %s10, %s8
  %12 = sst [smem:[#allocation2]] %s6
  $region1: #{_forward.1} parent=0
    #allocation3 [shape = 'u8[512]{0}', space=vmem, size = 0x400, scoped, tag = 'output window, operand 0, single buffered']
    #allocation4 [shape = 's32[1]{0}', space=sflag, size = 0x4, scoped, tag = 'scoped memory for _forward.1']
    %13 = vsyncpa [#allocation4], 0
    // Predicated region
    $region2: #{_forward.1} parent=1 // pred_check
      _
    $region3: #{_forward.1} parent=1 // pred_check_branch
      %15 = sbr.rel (0) target = $region5
    $region4: #{_forward.1} parent=1 // pred_region
      _
    $region5: #{_forward.1} parent=1 // pred_fallthru
      _
    // Predicated region
    $region6: #{_forward.1} parent=1 // pred_check
      _
    $region7: #{_forward.1} parent=1 // pred_check_branch
      %17 = sbr.rel (0) target = $region9
    $region8: #{_forward.1} parent=1 // pred_region
      _
    $region9: #{_forward.1} parent=1 // pred_fallthru
      _
    // Predicated region
    $region10: #{_forward.1} parent=1 // pred_check
      _
    $region11: #{_forward.1} parent=1 // pred_check_branch
      %19 = sbr.rel (0) target = $region13
    $region12: #{_forward.1} parent=1 // pred_region
      _
    $region13: #{_forward.1} parent=1 // pred_fallthru
      _
    // Predicated region
    $region14: #{_forward.1} parent=1 // pred_check
      _
    $region15: #{_forward.1} parent=1 // pred_check_branch
      %21 = sbr.rel (0) target = $region17
    $region16: #{_forward.1} parent=1 // pred_region
      _
    $region17: #{_forward.1} parent=1 // pred_fallthru
      _
    // Predicated region
    $region18: #{_forward.1} parent=1 // pred_check
      _
    $region19: #{_forward.1} parent=1 // pred_check_branch
      %23 = sbr.rel (0) target = $region21
    $region20: #{_forward.1} parent=1 // pred_region
      _
    $region21: #{_forward.1} parent=1 // pred_fallthru
      _
    // Predicated region
    $region22: #{_forward.1} parent=1 // pred_check
      _
    $region23: #{_forward.1} parent=1 // pred_check_branch
      %25 = sbr.rel (0) target = $region25
    $region24: #{_forward.1} parent=1 // pred_region
      _
    $region25: #{_forward.1} parent=1 // pred_fallthru
      _
    // Predicated region
    $region26: #{_forward.1} parent=1 // pred_check
      _
    $region27: #{_forward.1} parent=1 // pred_check_branch
      %27 = sbr.rel (0) target = $region29
    $region28: #{_forward.1} parent=1 // pred_region
      _
    $region29: #{_forward.1} parent=1 // pred_fallthru
      _
    %v29 = vld [vmem:[%s0] sm:$0xff]
    %v30 = vpack.c.bf16 %v29, %v29
    %v31 = vld [vmem:[%s1] sm:$0xf]
    %v32 = vld [vmem:[%s1 + $0x4] sm:$0xf]
    %v33 = vld [vmem:[%s1 + $0x8] sm:$0xf]
    %v34 = vld [vmem:[%s1 + $0xc] sm:$0xf]
    %v35 = vld [vmem:[%s1 + $0x10] sm:$0xf]
    %v36 = vld [vmem:[%s1 + $0x14] sm:$0xf]
    %v37 = vld [vmem:[%s1 + $0x18] sm:$0xf]
    %v38 = vld [vmem:[%s1 + $0x1c] sm:$0xf]
    %v39 = vld [vmem:[%s1 + $0x20] sm:$0xf]
    %v40 = vld [vmem:[%s1 + $0x24] sm:$0xf]
    %v41 = vld [vmem:[%s1 + $0x28] sm:$0xf]
    %v42 = vld [vmem:[%s1 + $0x2c] sm:$0xf]
    %v43 = vld [vmem:[%s1 + $0x30] sm:$0xf]
    %v44 = vld [vmem:[%s1 + $0x34] sm:$0xf]
    %v45 = vld [vmem:[%s1 + $0x38] sm:$0xf]
    %v46 = vld [vmem:[%s1 + $0x3c] sm:$0xf]
    %v47 = vld [vmem:[%s2] sm:$0x1]
    %v49 = vlaneseq
    %v50 = vshrl.u32 %v49, 7
    %v51 = vsub.s32 0, %v50
    %v52 = vrot.slane %v47, %v51
    %v70 = vunpack.c.l.b16 %v31
    %v71 = vunpack.c.l.b16 %v32
    %v72 = vunpack.c.l.b16 %v33
    %v73 = vunpack.c.l.b16 %v34
    %v74 = vunpack.c.l.b16 %v35
    %v75 = vunpack.c.l.b16 %v36
    %v76 = vunpack.c.l.b16 %v37
    %v77 = vunpack.c.l.b16 %v38
    %v78 = vunpack.c.l.b16 %v39
    %v79 = vunpack.c.l.b16 %v40
    %v80 = vunpack.c.l.b16 %v41
    %v81 = vunpack.c.l.b16 %v42
    %v82 = vunpack.c.l.b16 %v43
    %v83 = vunpack.c.l.b16 %v44
    %v84 = vunpack.c.l.b16 %v45
    %v85 = vunpack.c.l.b16 %v46
    %v86 = vpack.c.b16 %v71, %v70
    %v87 = vpack.c.b16 %v73, %v72
    %v88 = vpack.c.b16 %v75, %v74
    %v89 = vpack.c.b16 %v77, %v76
    %v90 = vpack.c.b16 %v79, %v78
    %v91 = vpack.c.b16 %v81, %v80
    %v92 = vpack.c.b16 %v83, %v82
    %v93 = vpack.c.b16 %v85, %v84
    %102 = vmatprep.subr.bf16.mxu0 0
    %103 = vmatpush1.bf16.msra.mxu0 %v93
    %104 = vmatprep.subr.bf16.mxu0 0
    %105 = vmatpush1.bf16.msra.mxu0 %v92
    %106 = vmatprep.subr.bf16.mxu0 0
    %107 = vmatpush1.bf16.msra.mxu0 %v91
    %108 = vmatprep.subr.bf16.mxu0 0
    %109 = vmatpush1.bf16.msra.mxu0 %v90
    %110 = vmatprep.subr.bf16.mxu0 0
    %111 = vmatpush1.bf16.msra.mxu0 %v89
    %112 = vmatprep.subr.bf16.mxu0 0
    %113 = vmatpush1.bf16.msra.mxu0 %v88
    %114 = vmatprep.subr.bf16.mxu0 0
    %115 = vmatpush1.bf16.msra.mxu0 %v87
    %116 = vmatprep.subr.bf16.mxu0 0
    %117 = vmatpush1.bf16.msra.mxu0 %v86
    %118 = vmatprep.subr.bf16.mxu0 0
    %119 = vmatpush2.bf16.msra.mxu0 0
    %120 = vmatprep.subr.bf16.mxu0 0
    %121 = vmatpush2.bf16.msra.mxu0 0
    %122 = vmatprep.subr.bf16.mxu0 0
    %123 = vmatpush2.bf16.msra.mxu0 0
    %124 = vmatprep.subr.bf16.mxu0 0
    %125 = vmatpush2.bf16.msra.mxu0 0
    %126 = vmatprep.subr.bf16.mxu0 0
    %127 = vmatpush2.bf16.msra.mxu0 0
    %128 = vmatprep.subr.bf16.mxu0 0
    %129 = vmatpush2.bf16.msra.mxu0 0
    %130 = vmatprep.subr.bf16.mxu0 0
    %131 = vmatpush2.bf16.msra.mxu0 0
    %132 = vmatprep.subr.bf16.mxu0 0
    %133 = vmatpush2.bf16.msra.mxu0 0
    %134 = vmatprep.mubr.bf16.mxu0 0
    %135 = vmatmul.mubr.bf16.gmra.mxu0 %v30
    %v136 = vpop.f32.mrf.mxu0
    %v137 = vadd.f32 %v52, %v136
    %v138 = vpop.f32.mrf.mxu0
    %v139 = vpop.f32.mrf.mxu0
    %v140 = vpop.f32.mrf.mxu0
    %141 = vdwg.mxu0
    %v142 = vmax.f32 %v137, 0.0
    %v143 = vpack.c.bf16 %v142, %v142
    %v144 = vld [vmem:[%s3] sm:$0xf]
    %v145 = vld [vmem:[%s3 + $0x4] sm:$0xf]
    %v146 = vld [vmem:[%s3 + $0x8] sm:$0xf]
    %v147 = vld [vmem:[%s3 + $0xc] sm:$0xf]
    %v148 = vld [vmem:[%s3 + $0x10] sm:$0xf]
    %v149 = vld [vmem:[%s3 + $0x14] sm:$0xf]
    %v150 = vld [vmem:[%s3 + $0x18] sm:$0xf]
    %v151 = vld [vmem:[%s3 + $0x1c] sm:$0xf]
    %v152 = vld [vmem:[%s4] sm:$0x1]
    %v154 = vlaneseq
    %v155 = vshrl.u32 %v154, 7
    %v156 = vsub.s32 0, %v155
    %v157 = vrot.slane %v152, %v156
    %v167 = vunpack.c.l.b16 %v144
    %v168 = vunpack.c.l.b16 %v145
    %v169 = vunpack.c.l.b16 %v146
    %v170 = vunpack.c.l.b16 %v147
    %v171 = vunpack.c.l.b16 %v148
    %v172 = vunpack.c.l.b16 %v149
    %v173 = vunpack.c.l.b16 %v150
    %v174 = vunpack.c.l.b16 %v151
    %v175 = vpack.c.b16 %v168, %v167
    %v176 = vpack.c.b16 %v170, %v169
    %v177 = vpack.c.b16 %v172, %v171
    %v178 = vpack.c.b16 %v174, %v173
    %vm183 = vcmask 523264
    %v185 = vsel %vm183, %v143, 0
    %187 = vmatprep.subr.bf16.mxu0 0
    %188 = vmatpush1.bf16.msra.mxu0 0
    %189 = vmatprep.subr.bf16.mxu0 0
    %190 = vmatpush1.bf16.msra.mxu0 0
    %191 = vmatprep.subr.bf16.mxu0 0
    %192 = vmatpush1.bf16.msra.mxu0 0
    %193 = vmatprep.subr.bf16.mxu0 0
    %194 = vmatpush1.bf16.msra.mxu0 0
    %195 = vmatprep.subr.bf16.mxu0 0
    %196 = vmatpush1.bf16.msra.mxu0 %v178
    %197 = vmatprep.subr.bf16.mxu0 0
    %198 = vmatpush1.bf16.msra.mxu0 %v177
    %199 = vmatprep.subr.bf16.mxu0 0
    %200 = vmatpush1.bf16.msra.mxu0 %v176
    %201 = vmatprep.subr.bf16.mxu0 0
    %202 = vmatpush1.bf16.msra.mxu0 %v175
    %203 = vmatprep.subr.bf16.mxu0 0
    %204 = vmatpush2.bf16.msra.mxu0 0
    %205 = vmatprep.subr.bf16.mxu0 0
    %206 = vmatpush2.bf16.msra.mxu0 0
    %207 = vmatprep.subr.bf16.mxu0 0
    %208 = vmatpush2.bf16.msra.mxu0 0
    %209 = vmatprep.subr.bf16.mxu0 0
    %210 = vmatpush2.bf16.msra.mxu0 0
    %211 = vmatprep.subr.bf16.mxu0 0
    %212 = vmatpush2.bf16.msra.mxu0 0
    %213 = vmatprep.subr.bf16.mxu0 0
    %214 = vmatpush2.bf16.msra.mxu0 0
    %215 = vmatprep.subr.bf16.mxu0 0
    %216 = vmatpush2.bf16.msra.mxu0 0
    %217 = vmatprep.subr.bf16.mxu0 0
    %218 = vmatpush2.bf16.msra.mxu0 0
    %219 = vmatprep.mubr.bf16.mxu0 0
    %220 = vmatmul.mubr.bf16.gmra.mxu0 %v185
    %v221 = vpop.f32.mrf.mxu0
    %v222 = vadd.f32 %v157, %v221
    %v223 = vpop.f32.mrf.mxu0
    %v224 = vpop.f32.mrf.mxu0
    %v225 = vpop.f32.mrf.mxu0
    %226 = vdwg.mxu0
    %v227 = vmax.f32 %v222, 0.0
    %v228 = vld [vmem:[%s5] sm:$0x1]
    %s229 = sld [smem:[#allocation2]]
    %v230 = vstv %s229
    %vm231 = vcmask 261120
    %v233 = vsel %vm231, %v228, 0
    %v236 = vsel %vm231, %v227, 0
    %238 = vmatprep.subr.mxu0 0.0
    %239 = vmatpush1.xpose.msra.mxu0 0.0
    %240 = vmatprep.subr.mxu0 0.0
    %241 = vmatpush1.xpose.msra.mxu0 0.0
    %242 = vmatprep.subr.mxu0 0.0
    %243 = vmatpush1.xpose.msra.mxu0 0.0
    %244 = vmatprep.subr.mxu0 0.0
    %245 = vmatpush1.xpose.msra.mxu0 0.0
    %246 = vmatprep.subr.mxu0 0.0
    %247 = vmatpush1.xpose.msra.mxu0 0.0
    %248 = vmatprep.subr.mxu0 0.0
    %249 = vmatpush1.xpose.msra.mxu0 0.0
    %250 = vmatprep.subr.mxu0 0.0
    %251 = vmatpush1.xpose.msra.mxu0 0.0
    %252 = vmatprep.subr.mxu0 0.0
    %253 = vmatpush1.xpose.msra.mxu0 0.0
    %254 = vmatprep.subr.mxu0 0.0
    %255 = vmatpush1.xpose.msra.mxu0 0.0
    %256 = vmatprep.subr.mxu0 0.0
    %257 = vmatpush1.xpose.msra.mxu0 0.0
    %258 = vmatprep.subr.mxu0 0.0
    %259 = vmatpush1.xpose.msra.mxu0 0.0
    %260 = vmatprep.subr.mxu0 0.0
    %261 = vmatpush1.xpose.msra.mxu0 0.0
    %262 = vmatprep.subr.mxu0 0.0
    %263 = vmatpush1.xpose.msra.mxu0 0.0
    %264 = vmatprep.subr.mxu0 0.0
    %265 = vmatpush1.xpose.msra.mxu0 0.0
    %266 = vmatprep.subr.mxu0 0.0
    %267 = vmatpush1.xpose.msra.mxu0 0.0
    %268 = vmatprep.subr.mxu0 0.0
    %269 = vmatpush1.xpose.msra.mxu0 %v236
    %270 = vmatprep.subr.mxu0 0.0
    %271 = vmatpush2.xpose.msra.mxu0 0.0
    %272 = vmatprep.subr.mxu0 0.0
    %273 = vmatpush2.xpose.msra.mxu0 0.0
    %274 = vmatprep.subr.mxu0 0.0
    %275 = vmatpush2.xpose.msra.mxu0 0.0
    %276 = vmatprep.subr.mxu0 0.0
    %277 = vmatpush2.xpose.msra.mxu0 0.0
    %278 = vmatprep.subr.mxu0 0.0
    %279 = vmatpush2.xpose.msra.mxu0 0.0
    %280 = vmatprep.subr.mxu0 0.0
    %281 = vmatpush2.xpose.msra.mxu0 0.0
    %282 = vmatprep.subr.mxu0 0.0
    %283 = vmatpush2.xpose.msra.mxu0 0.0
    %284 = vmatprep.subr.mxu0 0.0
    %285 = vmatpush2.xpose.msra.mxu0 0.0
    %286 = vmatprep.subr.mxu0 0.0
    %287 = vmatpush2.xpose.msra.mxu0 0.0
    %288 = vmatprep.subr.mxu0 0.0
    %289 = vmatpush2.xpose.msra.mxu0 0.0
    %290 = vmatprep.subr.mxu0 0.0
    %291 = vmatpush2.xpose.msra.mxu0 0.0
    %292 = vmatprep.subr.mxu0 0.0
    %293 = vmatpush2.xpose.msra.mxu0 0.0
    %294 = vmatprep.subr.mxu0 0.0
    %295 = vmatpush2.xpose.msra.mxu0 0.0
    %296 = vmatprep.subr.mxu0 0.0
    %297 = vmatpush2.xpose.msra.mxu0 0.0
    %298 = vmatprep.subr.mxu0 0.0
    %299 = vmatpush2.xpose.msra.mxu0 0.0
    %300 = vmatprep.subr.mxu0 0.0
    %301 = vmatpush2.xpose.msra.mxu0 0.0
    %302 = vmatprep.mubr.f32.mxu0 0.0
    %303 = vmatmul.mubr.f32.gmra.mxu0 %v233
    %v304 = vpop.f32.mrf.mxu0
    %v305 = vadd.f32 %v230, %v304
    %v306 = vpop.f32.mrf.mxu0
    %307 = vdwg.mxu0
    %v308 = vmax.f32 %v305, -1e+10
    %v309 = vmin.f32 %v308, 1e+10
    %v310 = vmax.f32 %v309, -30.0
    %v311 = vmin.f32 %v310, 30.0
    %v312 = vsub.f32 0.0, %v311
    %v313 = vmul.f32 %v312, 1.442695
    %v314 = vpow.pop %v313
    %v315 = vadd.f32 %v314, 1.0
    %v316 = vrcp.pop %v315
    %vm317 = vcmask 57344
    %318 = vst.msk [vmem:[#allocation3] sm:$0x1] %vm317, %v316
    // Predicated region
    $region30: #{_forward.1} parent=1 // pred_check
      _
    $region31: #{_forward.1} parent=1 // pred_check_branch
      %320 = sbr.rel (0) target = $region33
    $region32: #{_forward.1} parent=1 // pred_region
      %s322 = ssub.s32 16, 16
      %323 = vsyncadd [#allocation4], %s322
      %s325 = sshll.u32 [#allocation3], 4
      %s326 = int_to_ptr.vmem [resolvable:$true] %s325
      %328 = dma.vmem_to_hbm [thread:$0]  %s326, 16, %s7, [#allocation4]
    $region33: #{_forward.1} parent=1 // pred_fallthru
      _
    // Predicated region
    $region34: #{_forward.1} parent=1 // pred_check
      _
    $region35: #{_forward.1} parent=1 // pred_check_branch
      %330 = sbr.rel (0) target = $region37
    $region36: #{_forward.1} parent=1 // pred_region
      %331 = dma.done [#allocation4], 16
    $region37: #{_forward.1} parent=1 // pred_fallthru
      _
    %332 = vsyncpa [#allocation4], 1

</llo_original>
